<compile_context>
chip_gen: v7x
topology: tpu7x:2x2x1
jax: 0.10.0
libtpu: 0.0.40
codegen_flags: <defaults>
</compile_context>

<pallas_src>
import jax
import jax.numpy as jnp
from jax.experimental import pallas as pl
from jax.experimental.pallas import tpu as pltpu


def _round_up(x: int, m: int) -> int:
    return ((x + m - 1) // m) * m


def _linear_kernel(x_ref, wt_ref, b_ref, o_ref):
    # x_ref:  (tb, n_in)   activation tile (bf16 or f32)
    # wt_ref: (n_in, tn)   pre-transposed weight tile (grid-resident when tn==N)
    # b_ref:  (1, tn)      bias tile (f32)
    # o_ref:  (tb, tn)     lane-dense f32 output tile
    y = jnp.dot(x_ref[...], wt_ref[...], preferred_element_type=jnp.float32)
    o_ref[...] = y + b_ref[...]  # VPU add under MXU slack; broadcasts over rows


def _choose_batch_tile(B: int, block_b: int):
    """Batch tile and padded batch. Prefers >=2 grid steps (v7x dual-TC)."""
    if B > block_b:
        return block_b, _round_up(B, block_b)
    if B >= 16 and B % 16 == 0:
        return B // 2, B          # two steps, each a multiple of 8, no padding
    return B, B                   # single step; block dim == array dim, no pad


def _choose_n_tile(n_in: int, n_out_p: int, elem_bytes: int,
                   max_weight_block_bytes: int = 12 << 20):
    """Tile N so the per-step weight block stays under a v7x/v5e-safe budget."""
    cap = max(128, (max_weight_block_bytes // max(n_in * elem_bytes, 1)) // 128 * 128)
    tn = min(n_out_p, cap)
    return tn, _round_up(n_out_p, tn)


def _invariant_spec(block_shape, index_map):
    """Grid-invariant block: single-buffer it (never re-DMAed, half the VMEM)."""
    try:
        return pl.BlockSpec(block_shape, index_map, pipeline_mode=pl.Buffered(1))
    except TypeError:  # older JAX without the pipeline_mode kwarg
        return pl.BlockSpec(block_shape, index_map)


def make_smallnet_forward(w, b, *, use_bf16: bool = False, block_b: int = 256):
    """Build a jitted fn x -> x @ w.T + b (PyTorch nn.Linear semantics).

    The weight transpose / padding is done ONCE here, not per forward call.
    """
    n_out, n_in = w.shape
    assert b.shape == (n_out,)

    operand_dtype = jnp.bfloat16 if use_bf16 else jnp.float32
    elem_bytes = 2 if use_bf16 else 4

    n_out_p = _round_up(n_out, 128)
    tn, n_out_pp = _choose_n_tile(n_in, n_out_p, elem_bytes)
    grid_n = n_out_pp // tn

    # One-time weight transpose + lane-dense N padding; K is never padded.
    wt_p = jnp.zeros((n_in, n_out_pp), operand_dtype).at[:, :n_out].set(
        w.T.astype(operand_dtype))
    bias_p = jnp.zeros((1, n_out_pp), jnp.float32).at[0, :n_out].set(
        b.astype(jnp.float32))

    block_b = _round_up(max(block_b, 8), 8)

    @jax.jit
    def forward(x):
        B, n_in_x = x.shape
        assert n_in_x == n_in, "weight / input feature mismatch"

        tb, b_pad = _choose_batch_tile(B, block_b)
        grid_b = b_pad // tb

        x_in = x.astype(operand_dtype)
        if b_pad != B:
            # Pad only the batch (sublane) axis, and only when the grid needs it.
            x_in = jnp.zeros((b_pad, n_in), operand_dtype).at[:B].set(x_in)

        # Weight / bias are grid-invariant only when N is not tiled.
        if grid_n == 1:
            w_spec = _invariant_spec((n_in, tn), lambda i, j: (0, j))
            b_spec = _invariant_spec((1, tn), lambda i, j: (0, j))
        else:
            w_spec = pl.BlockSpec((n_in, tn), lambda i, j: (0, j))
            b_spec = pl.BlockSpec((1, tn), lambda i, j: (0, j))

        # VMEM budget from the actual tiles (assume double-buffering everywhere),
        # never below the default scoped limits, capped safely under v7x's 64 MiB.
        x_t = tb * n_in * elem_bytes
        w_t = n_in * tn * elem_bytes
        bias_t = tn * 4
        o_t = tb * tn * 4
        need = 2 * (x_t + o_t + w_t + bias_t)
        vmem_limit = int(min(48 << 20, max(need + (4 << 20), 32 << 20)))

        out_p = pl.pallas_call(
            _linear_kernel,
            out_shape=jax.ShapeDtypeStruct((b_pad, n_out_pp), jnp.float32),
            grid_spec=pltpu.PrefetchScalarGridSpec(
                num_scalar_prefetch=0,
                grid=(grid_b, grid_n),
                in_specs=[
                    # x: one batch tile per i; last dim == full n_in (no K pad),
                    # resident across the (inner) N axis.
                    pl.BlockSpec((tb, n_in), lambda i, j: (i, 0)),
                    w_spec,
                    b_spec,
                ],
                out_specs=pl.BlockSpec((tb, tn), lambda i, j: (i, j)),
            ),
            compiler_params=pltpu.CompilerParams(
                # Both axes produce independent output tiles -> parallel
                # (lets v7x shard grid steps across its two TensorCores).
                dimension_semantics=("parallel", "parallel"),
                vmem_limit_bytes=vmem_limit,
            ),
        )(x_in, wt_p, bias_p)

        return out_p[:B, :n_out]

    return forward


if __name__ == "__main__":
    # Shapes consistent with smallnet(n_input, n_hidden, n_output);
    # n_hidden is unused by the module's forward (it only has one Linear).
    batch, n_input, n_hidden, n_output = 8, 32, 64, 16

    key = jax.random.PRNGKey(0)
    kx, kw, kb = jax.random.split(key, 3)

    # Mimic torch.nn.Linear default init: U(-1/sqrt(fan_in), 1/sqrt(fan_in)).
    bound = 1.0 / jnp.sqrt(jnp.float32(n_input))
    w = jax.random.uniform(kw, (n_output, n_input), jnp.float32, -bound, bound)
    b = jax.random.uniform(kb, (n_output,), jnp.float32, -bound, bound)
    x = jax.random.normal(kx, (batch, n_input), jnp.float32)

    y_ref = x @ w.T + b

    # f32 path (bit-faithful to the PyTorch module).
    fwd_f32 = make_smallnet_forward(w, b, use_bf16=False)
    y = jax.block_until_ready(fwd_f32(x))
    assert y.shape == (batch, n_output)
    assert jnp.allclose(y, y_ref, atol=1e-5, rtol=1e-5)

    # bf16-operand path (f32 accumulation) - the perf-recommended mode.
    fwd_bf16 = make_smallnet_forward(w, b, use_bf16=True)
    y16 = jax.block_until_ready(fwd_bf16(x))
    assert y16.shape == (batch, n_output)
    assert jnp.allclose(y16, y_ref, atol=5e-2, rtol=5e-2)

    print("KERNEL_OK")
</pallas_src>

<mosaic_0001>
module attributes {stable_mosaic.version = 11 : i64} {
  func.func @_linear_kernel(%arg0: i32, %arg1: i32, %arg2: memref<8x32xf32, #tpu.memory_space<vmem>>, %arg3: memref<32x128xf32, #tpu.memory_space<vmem>>, %arg4: memref<1x128xf32, #tpu.memory_space<vmem>>, %arg5: memref<8x128xf32, #tpu.memory_space<vmem>>) attributes {dimension_semantics = [#tpu.dimension_semantics<parallel>, #tpu.dimension_semantics<parallel>], iteration_bounds = array<i64: 1, 1>, scalar_prefetch = 0 : i64, scratch_operands = 0 : i64, tpu.core_type = #tpu.core_type<tc>, window_params = [{transform_indices = @transform_0, window_bounds = array<i64: 8, 32>}, {pipeline_mode = #tpu.pipeline_mode<synchronous>, transform_indices = @transform_1, window_bounds = array<i64: 32, 128>}, {pipeline_mode = #tpu.pipeline_mode<synchronous>, transform_indices = @transform_2, window_bounds = array<i64: 1, 128>}, {transform_indices = @transform_3, window_bounds = array<i64: 8, 128>}]} {
    %c0 = arith.constant 0 : index
    %c0_0 = arith.constant 0 : index
    %0 = vector.load %arg2[%c0, %c0_0] : memref<8x32xf32, #tpu.memory_space<vmem>>, vector<8x32xf32>
    %c0_1 = arith.constant 0 : index
    %c0_2 = arith.constant 0 : index
    %1 = vector.load %arg3[%c0_1, %c0_2] : memref<32x128xf32, #tpu.memory_space<vmem>>, vector<32x128xf32>
    %cst = arith.constant dense<0.000000e+00> : vector<8x128xf32>
    %2 = tpu.matmul %0, %1, %cst {dimension_numbers = #tpu.dot_dimension_numbers<[1], [0], [0], [1], [0, 0, 1, 1], [], []>} : vector<8x32xf32>, vector<32x128xf32>, vector<8x128xf32> -> vector<8x128xf32>
    %c0_3 = arith.constant 0 : index
    %c0_4 = arith.constant 0 : index
    %3 = vector.load %arg4[%c0_3, %c0_4] : memref<1x128xf32, #tpu.memory_space<vmem>>, vector<1x128xf32>
    %4 = vector.broadcast %3 : vector<1x128xf32> to vector<8x128xf32>
    %5 = arith.addf %2, %4 : vector<8x128xf32>
    %c0_5 = arith.constant 0 : index
    %c0_6 = arith.constant 0 : index
    %6 = vector.load %arg5[%c0_5, %c0_6] : memref<8x128xf32, #tpu.memory_space<vmem>>, vector<8x128xf32>
    tpu.vector_store %arg5[%c0_5, %c0_6], %5 {strides = array<i32>} : memref<8x128xf32, #tpu.memory_space<vmem>>, vector<8x128xf32>,
    return
  }
  func.func @transform_0(%arg0: i32, %arg1: i32) -> (i32, i32) {
    %c0_i32 = arith.constant 0 : i32
    %c0_i32_0 = arith.constant 0 : i32
    return %arg0, %c0_i32 : i32, i32
  }
  func.func @transform_1(%arg0: i32, %arg1: i32) -> (i32, i32) {
    %c0_i32 = arith.constant 0 : i32
    %c0_i32_0 = arith.constant 0 : i32
    return %c0_i32, %arg1 : i32, i32
  }
  func.func @transform_2(%arg0: i32, %arg1: i32) -> (i32, i32) {
    %c0_i32 = arith.constant 0 : i32
    %c0_i32_0 = arith.constant 0 : i32
    return %c0_i32, %arg1 : i32, i32
  }
  func.func @transform_3(%arg0: i32, %arg1: i32) -> (i32, i32) {
    %c0_i32 = arith.constant 0 : i32
    return %arg0, %arg1 : i32, i32
  }
}

</mosaic_0001>

<llo_original>
// kernel: forward.1
$region0: #{forward.1}
  #allocation0 [shape = 'u32[]', space=smem, size = 0x4, offset = 0x4, fixed_abs, tag = 'smem constant byte address 0x4 - core index']
  #allocation1 [shape = 'u32[144,128]{1,0:T(1,128)}', space=vmem, size = 0x12000, scoped, tag = 'internal scratch']
  %s0 = inlined_call_operand.hbm [shape: f32[8,32], index: 0, kind: input, shape index: {}]
  %s1 = inlined_call_operand.hbm [shape: f32[32,128], index: 1, kind: input, shape index: {}]
  %s2 = inlined_call_operand.vmem [shape: f32[1,128], index: 2, kind: input, shape index: {}]
  %s3 = inlined_call_operand.hbm [shape: f32[8,128], index: 3, kind: output, shape index: {}]
  %s4 = sld [smem:[#allocation0]]
  $region30: #{forward.1} parent=0
    _
  %s6 = ssub.s32 1, %s4
  %s7 = scalar_select 0, %s6, %s4
  $region1: #{forward.1} parent=0
    #allocation2 [shape = 'u8[4096]{0}', space=vmem, size = 0x1000, scoped, tag = 'input window, operand 0, single buffered']
    #allocation3 [shape = 's32[1]{0}', space=sflag, size = 0x4, scoped, tag = 'scoped memory for forward.1']
    #allocation4 [shape = 's32[1]{0}', space=sflag, size = 0x4, scoped, tag = 'scoped memory for forward.1']
    #allocation5 [shape = 'u8[16384]{0}', space=vmem, size = 0x4000, scoped, tag = 'input window, operand 1, single buffered']
    #allocation6 [shape = 's32[1]{0}', space=sflag, size = 0x4, scoped, tag = 'scoped memory for forward.1']
    #allocation7 [shape = 'u8[4096]{0}', space=vmem, size = 0x1000, scoped, tag = 'output window, operand 0, single buffered']
    %8 = vsyncpa [#allocation3], 0
    %9 = vsyncpa [#allocation6], 0
    %10 = vsyncpa [#allocation4], 0
    // Predicated region
    $region2: #{forward.1} parent=1 // pred_check
      _
    $region3: #{forward.1} parent=1 // pred_check_branch
      %12 = sbr.rel (0) target = $region5
    $region4: #{forward.1} parent=1 // pred_region
      %s14 = ssub.s32 128, 128
      %15 = vsyncadd [#allocation3], %s14
      %s17 = sshll.u32 [#allocation2], 4
      %s18 = int_to_ptr.vmem [resolvable:$true] %s17
      %20 = dma.hbm_to_vmem [thread:$0]  %s0, 128, %s18, [#allocation3]
    $region5: #{forward.1} parent=1 // pred_fallthru
      _
    // Predicated region
    $region6: #{forward.1} parent=1 // pred_check
      _
    $region7: #{forward.1} parent=1 // pred_check_branch
      %22 = sbr.rel (0) target = $region9
    $region8: #{forward.1} parent=1 // pred_region
      %s24 = ssub.s32 512, 512
      %25 = vsyncadd [#allocation6], %s24
      %s26 = sshll.u32 [#allocation5], 4
      %s27 = int_to_ptr.vmem [resolvable:$true] %s26
      %32 = dma.hbm_to_vmem [thread:$0]  %s1, 512, %s27, [#allocation6], 128, 128, 8
    $region9: #{forward.1} parent=1 // pred_fallthru
      _
    // Predicated region
    $region10: #{forward.1} parent=1 // pred_check
      _
    $region11: #{forward.1} parent=1 // pred_check_branch
      %34 = sbr.rel (0) target = $region13
    $region12: #{forward.1} parent=1 // pred_region
      _
    $region13: #{forward.1} parent=1 // pred_fallthru
      _
    // Predicated region
    $region14: #{forward.1} parent=1 // pred_check
      _
    $region15: #{forward.1} parent=1 // pred_check_branch
      %36 = sbr.rel (0) target = $region17
    $region16: #{forward.1} parent=1 // pred_region
      %37 = dma.done [#allocation3], 128
    $region17: #{forward.1} parent=1 // pred_fallthru
      _
    // Predicated region
    $region18: #{forward.1} parent=1 // pred_check
      _
    $region19: #{forward.1} parent=1 // pred_check_branch
      %39 = sbr.rel (0) target = $region21
    $region20: #{forward.1} parent=1 // pred_region
      %40 = dma.done [#allocation6], 512
    $region21: #{forward.1} parent=1 // pred_fallthru
      _
    %v41 = vld [vmem:[#allocation2] sm:$0xff]
    %v42 = vld [vmem:[#allocation5] sm:$0xff]
    %v43 = vld [vmem:[#allocation5 + $0x8] sm:$0xff]
    %v44 = vld [vmem:[#allocation5 + $0x10] sm:$0xff]
    %v45 = vld [vmem:[#allocation5 + $0x18] sm:$0xff]
    %v46 = vld [vmem:[%s2] sm:$0x1]
    %v48 = vlaneseq
    %v49 = vshrl.u32 %v48, 7
    %v50 = vsub.s32 0, %v49
    %v51 = vrot.slane %v46, %v50
    %vm53 = vcmask 261120
    %v55 = vsel %vm53, %v41, 0
    %57 = vmatprep.subr.mxu0 0.0
    %58 = vmatpush1.msra.mxu0 %v42
    %59 = vmatprep.subr.mxu0 0.0
    %60 = vmatpush1.msra.mxu0 %v43
    %61 = vmatprep.subr.mxu0 0.0
    %62 = vmatpush1.msra.mxu0 %v44
    %63 = vmatprep.subr.mxu0 0.0
    %64 = vmatpush1.msra.mxu0 %v45
    %65 = vmatprep.subr.mxu0 0.0
    %66 = vmatpush1.msra.mxu0 0.0
    %67 = vmatprep.subr.mxu0 0.0
    %68 = vmatpush1.msra.mxu0 0.0
    %69 = vmatprep.subr.mxu0 0.0
    %70 = vmatpush1.msra.mxu0 0.0
    %71 = vmatprep.subr.mxu0 0.0
    %72 = vmatpush1.msra.mxu0 0.0
    %73 = vmatprep.subr.mxu0 0.0
    %74 = vmatpush1.msra.mxu0 0.0
    %75 = vmatprep.subr.mxu0 0.0
    %76 = vmatpush1.msra.mxu0 0.0
    %77 = vmatprep.subr.mxu0 0.0
    %78 = vmatpush1.msra.mxu0 0.0
    %79 = vmatprep.subr.mxu0 0.0
    %80 = vmatpush1.msra.mxu0 0.0
    %81 = vmatprep.subr.mxu0 0.0
    %82 = vmatpush1.msra.mxu0 0.0
    %83 = vmatprep.subr.mxu0 0.0
    %84 = vmatpush1.msra.mxu0 0.0
    %85 = vmatprep.subr.mxu0 0.0
    %86 = vmatpush1.msra.mxu0 0.0
    %87 = vmatprep.subr.mxu0 0.0
    %88 = vmatpush1.msra.mxu0 0.0
    %89 = vmatprep.subr.mxu0 0.0
    %90 = vmatpush1.msra.mxu0 0.0
    %91 = vmatprep.subr.mxu0 0.0
    %92 = vmatpush1.msra.mxu0 0.0
    %93 = vmatprep.subr.mxu0 0.0
    %94 = vmatpush1.msra.mxu0 0.0
    %95 = vmatprep.subr.mxu0 0.0
    %96 = vmatpush1.msra.mxu0 0.0
    %97 = vmatprep.subr.mxu0 0.0
    %98 = vmatpush1.msra.mxu0 0.0
    %99 = vmatprep.subr.mxu0 0.0
    %100 = vmatpush1.msra.mxu0 0.0
    %101 = vmatprep.subr.mxu0 0.0
    %102 = vmatpush1.msra.mxu0 0.0
    %103 = vmatprep.subr.mxu0 0.0
    %104 = vmatpush1.msra.mxu0 0.0
    %105 = vmatprep.subr.mxu0 0.0
    %106 = vmatpush1.msra.mxu0 0.0
    %107 = vmatprep.subr.mxu0 0.0
    %108 = vmatpush1.msra.mxu0 0.0
    %109 = vmatprep.subr.mxu0 0.0
    %110 = vmatpush1.msra.mxu0 0.0
    %111 = vmatprep.subr.mxu0 0.0
    %112 = vmatpush1.msra.mxu0 0.0
    %113 = vmatprep.subr.mxu0 0.0
    %114 = vmatpush1.msra.mxu0 0.0
    %115 = vmatprep.subr.mxu0 0.0
    %116 = vmatpush1.msra.mxu0 0.0
    %117 = vmatprep.subr.mxu0 0.0
    %118 = vmatpush1.msra.mxu0 0.0
    %119 = vmatprep.subr.mxu0 0.0
    %120 = vmatpush1.msra.mxu0 0.0
    %121 = vmatprep.mubr.f32.mxu0 0.0
    %122 = vmatmul.mubr.f32.gmra.mrb[0].mxu0 %v55
    %v123 = vpop.f32.mrb[0].mxu0
    %v124 = vadd.f32 %v51, %v123
    %v125 = vpop.f32.mrb[0].mxu0
    %126 = vdwg.mxu0
    %127 = vst [vmem:[#allocation7] sm:$0xff] %v124
    // Predicated region
    $region22: #{forward.1} parent=1 // pred_check
      _
    $region23: #{forward.1} parent=1 // pred_check_branch
      %129 = sbr.rel (0) target = $region25
    $region24: #{forward.1} parent=1 // pred_region
      %s131 = ssub.s32 128, 128
      %132 = vsyncadd [#allocation4], %s131
      %s134 = sshll.u32 [#allocation7], 4
      %s135 = int_to_ptr.vmem [resolvable:$true] %s134
      %137 = dma.vmem_to_hbm [thread:$0]  %s135, 128, %s3, [#allocation4]
    $region25: #{forward.1} parent=1 // pred_fallthru
      _
    // Predicated region
    $region26: #{forward.1} parent=1 // pred_check
      _
    $region27: #{forward.1} parent=1 // pred_check_branch
      %139 = sbr.rel (0) target = $region29
    $region28: #{forward.1} parent=1 // pred_region
      %140 = dma.done [#allocation4], 128
    $region29: #{forward.1} parent=1 // pred_fallthru
      _
    %141 = vsyncpa [#allocation3], 1
    %142 = vsyncpa [#allocation6], 1
    %143 = vsyncpa [#allocation4], 1

</llo_original>
